<compile_context>
chip_gen: v7x
topology: tpu7x:2x2x1
jax: 0.10.0
libtpu: 0.0.40
codegen_flags: <defaults>
</compile_context>

<pallas_src>
import jax
import jax.numpy as jnp
from jax.experimental import pallas as pl
from jax.experimental.pallas import tpu as pltpu


def _round_up(x: int, m: int) -> int:
    return (x + m - 1) // m * m


def _vmem_capacity_bytes() -> int:
    cap = 64 * 1024 * 1024  # conservative fallback (v7x per-TC VMEM)
    try:
        cap = int(getattr(pltpu.get_tpu_info(), "vmem_capacity_bytes", cap))
    except Exception:
        pass
    return cap


def _mlp_head_kernel(x_ref, w1_ref, b1_ref, w2_ref, b2_ref, out_ref):
    """One batch tile of: (scale-folded) Linear -> bias -> ReLU -> [Dropout p=0] -> Linear -> bias."""
    x = x_ref[...]
    if x.dtype != w1_ref.dtype:          # static (trace-time) branch: skipped when x is already bf16
        x = x.astype(w1_ref.dtype)
    h = jnp.dot(x, w1_ref[...], preferred_element_type=jnp.float32)        # [TB, H_pad], f32 accum
    h = jnp.maximum(h + b1_ref[...], 0.0)                                   # bias + ReLU (Dropout p=0.0 is identity)
    logits = jnp.dot(h.astype(w2_ref.dtype), w2_ref[...],
                     preferred_element_type=jnp.float32)                    # [TB, L_pad]
    out_ref[...] = (logits + b2_ref[...]).astype(out_ref.dtype)


def sequence_classification_head(pooled_output, params, *, block_b=512,
                                 matmul_dtype=jnp.bfloat16):
    """pooled_output: [B, input_size] (f32 or bf16).  Returns logits [B, num_labels] float32.

    NOTE: matmuls run in `matmul_dtype` (bf16 default) with f32 accumulation — a fidelity
    choice vs. the pure-f32 PyTorch module; pass matmul_dtype=jnp.float32 for exact fidelity.
    """
    v1, g1, b1, v2, g2, b2 = (params["v1"], params["g1"], params["b1"],
                              params["v2"], params["g2"], params["b2"])
    B, D_in = pooled_output.shape
    H = v1.shape[1]
    L = v2.shape[1]

    # ---- parameter-only prep: fold weight_norm(dim=None) scale g/||v||_F into the weights,
    #      pad feature dims to lane width, cast to matmul dtype (one-time, fuses) ----
    s1 = g1.reshape(()) * jax.lax.rsqrt(jnp.sum(v1.astype(jnp.float32) ** 2))
    s2 = g2.reshape(()) * jax.lax.rsqrt(jnp.sum(v2.astype(jnp.float32) ** 2))

    H_pad = _round_up(H, 128)
    L_pad = _round_up(L, 128)

    w1 = jnp.zeros((D_in, H_pad), matmul_dtype).at[:, :H].set(
        (v1.astype(jnp.float32) * s1).astype(matmul_dtype))
    w2 = jnp.zeros((H_pad, L_pad), matmul_dtype).at[:H, :L].set(
        (v2.astype(jnp.float32) * s2).astype(matmul_dtype))
    b1p = jnp.zeros((1, H_pad), jnp.float32).at[:, :H].set(b1.reshape(1, H).astype(jnp.float32))
    b2p = jnp.zeros((1, L_pad), jnp.float32).at[:, :L].set(b2.reshape(1, L).astype(jnp.float32))

    # ---- VMEM accounting (assume double-buffered residents to also cover the fallback path) ----
    w_item = jnp.dtype(matmul_dtype).itemsize
    x_item = jnp.dtype(pooled_output.dtype).itemsize
    D_lane = _round_up(D_in, 128)   # internal lane padding of the streamed x tile
    D_sub = _round_up(D_in, 8)
    resident = 2 * ((D_sub * H_pad + H_pad * L_pad) * w_item + 8 * (H_pad + L_pad) * 4)
    per_row = 2 * D_lane * x_item + 2 * L_pad * 4 + H_pad * 4   # x dbl-buf + out dbl-buf + f32 h

    # ---- batch tile: >= ~4 grid steps (v7x 2-TC sharding / pipelining), capped by VMEM budget ----
    cap = _vmem_capacity_bytes()
    TB = min(block_b, max(8, _round_up(pl.cdiv(B, 4), 8)))
    budget = cap * 3 // 4 - resident
    if budget > 8 * per_row:
        TB = min(TB, max(8, (budget // per_row) // 8 * 8))
    TB = max(8, min(TB, _round_up(B, 8)))
    num_tiles = pl.cdiv(B, TB)

    needed = resident + TB * per_row
    vmem_limit = int(min(max(needed + needed // 4, 32 * 1024 * 1024), cap * 3 // 4))

    def _call(resident_pipeline_mode):
        kw = {} if resident_pipeline_mode is None else {"pipeline_mode": resident_pipeline_mode}
        return pl.pallas_call(
            _mlp_head_kernel,
            out_shape=jax.ShapeDtypeStruct((B, L_pad), jnp.float32),
            grid=(num_tiles,),
            in_specs=[
                pl.BlockSpec((TB, D_in), lambda i: (i, 0)),                 # x: streamed, partial last tile masked
                pl.BlockSpec((D_in, H_pad), lambda i: (0, 0), **kw),        # w1: VMEM-resident
                pl.BlockSpec((1, H_pad), lambda i: (0, 0), **kw),           # b1: VMEM-resident
                pl.BlockSpec((H_pad, L_pad), lambda i: (0, 0), **kw),       # w2: VMEM-resident
                pl.BlockSpec((1, L_pad), lambda i: (0, 0), **kw),           # b2: VMEM-resident
            ],
            out_specs=pl.BlockSpec((TB, L_pad), lambda i: (i, 0)),          # lane-dense output tile
            compiler_params=pltpu.CompilerParams(
                dimension_semantics=("parallel",),                          # shard batch tiles on v7x's 2 TCs
                vmem_limit_bytes=vmem_limit),
        )(pooled_output, w1, b1p, w2, b2p)

    try:
        out = _call(pl.Buffered(1))      # single-buffer the constant-index resident weights
    except Exception:
        out = _call(None)                # fall back to default double-buffering if unsupported

    return out[:, :L]


def init_params(key, input_size, num_labels, hidden=512):
    """Synthetic parameters matching the module's shapes (weights stored as [in, out] = torch W.T).

    weight_norm(dim=None) adds a scalar gain g per layer, initialized to ||v||_F so that
    initially w == v (as in PyTorch right after applying weight_norm)."""
    k1, k2, k3, k4 = jax.random.split(key, 4)
    v1 = jax.random.normal(k1, (input_size, hidden), jnp.float32) * 0.02
    b1 = jax.random.normal(k2, (1, hidden), jnp.float32) * 0.01
    v2 = jax.random.normal(k3, (hidden, num_labels), jnp.float32) * 0.02
    b2 = jax.random.normal(k4, (1, num_labels), jnp.float32) * 0.01
    g1 = jnp.sqrt(jnp.sum(v1 * v1)).reshape(1, 1)
    g2 = jnp.sqrt(jnp.sum(v2 * v2)).reshape(1, 1)
    return {"v1": v1, "g1": g1, "b1": b1, "v2": v2, "g2": g2, "b2": b2}


def _reference(x, p, matmul_dtype=jnp.float32):
    """Pure-JAX reference.  Folds the weight-norm scale into the weights (mathematically identical
    to the PyTorch module); matmul_dtype=bfloat16 mirrors the kernel's MXU input quantization."""
    s1 = p["g1"].reshape(()) / jnp.sqrt(jnp.sum(p["v1"].astype(jnp.float32) ** 2))
    s2 = p["g2"].reshape(()) / jnp.sqrt(jnp.sum(p["v2"].astype(jnp.float32) ** 2))
    w1 = (p["v1"].astype(jnp.float32) * s1).astype(matmul_dtype)
    w2 = (p["v2"].astype(jnp.float32) * s2).astype(matmul_dtype)
    h = jnp.dot(x.astype(matmul_dtype), w1, preferred_element_type=jnp.float32) + p["b1"]
    h = jnp.maximum(h, 0.0)
    return jnp.dot(h.astype(matmul_dtype), w2, preferred_element_type=jnp.float32) + p["b2"]


if __name__ == "__main__":
    key = jax.random.PRNGKey(0)
    kx, kx2, kp = jax.random.split(key, 3)

    B, input_size, num_labels = 8, 32, 8
    pooled_output = jax.random.normal(kx, (B, input_size), jnp.float32)
    params = init_params(kp, input_size, num_labels)

    # --- small-batch case: single grid step, everything resident ---
    logits = sequence_classification_head(pooled_output, params)
    logits = jax.block_until_ready(logits)
    assert logits.shape == (B, num_labels)
    assert jnp.allclose(logits, _reference(pooled_output, params, jnp.bfloat16),
                        atol=1e-4, rtol=1e-4), "mismatch vs bf16-matmul reference"
    assert jnp.allclose(logits, _reference(pooled_output, params, jnp.float32),
                        atol=1e-2, rtol=1e-2), "mismatch vs f32 reference"

    # --- gridded case: multiple batch tiles + a masked partial last tile (40 = 16+16+8) ---
    B2 = 40
    pooled2 = jax.random.normal(kx2, (B2, input_size), jnp.float32)
    logits2 = jax.block_until_ready(
        sequence_classification_head(pooled2, params, block_b=16))
    assert logits2.shape == (B2, num_labels)
    assert jnp.allclose(logits2, _reference(pooled2, params, jnp.bfloat16),
                        atol=1e-4, rtol=1e-4), "gridded mismatch vs bf16-matmul reference"
    assert jnp.allclose(logits2, _reference(pooled2, params, jnp.float32),
                        atol=1e-2, rtol=1e-2), "gridded mismatch vs f32 reference"

    # --- bf16 producer path: x streamed as bf16, in-kernel cast skipped ---
    logits3 = jax.block_until_ready(
        sequence_classification_head(pooled_output.astype(jnp.bfloat16), params))
    assert jnp.allclose(logits3, _reference(pooled_output, params, jnp.bfloat16),
                        atol=1e-4, rtol=1e-4), "bf16-x mismatch vs bf16-matmul reference"

    print("KERNEL_OK")
</pallas_src>

<mosaic_0001>
module attributes {stable_mosaic.version = 11 : i64} {
  func.func @_mlp_head_kernel(%arg0: i32, %arg1: memref<8x32xf32, #tpu.memory_space<vmem>>, %arg2: memref<32x512xbf16, #tpu.memory_space<vmem>>, %arg3: memref<1x512xf32, #tpu.memory_space<vmem>>, %arg4: memref<512x128xbf16, #tpu.memory_space<vmem>>, %arg5: memref<1x128xf32, #tpu.memory_space<vmem>>, %arg6: memref<8x128xf32, #tpu.memory_space<vmem>>) attributes {dimension_semantics = [#tpu.dimension_semantics<parallel>], iteration_bounds = array<i64: 1>, scalar_prefetch = 0 : i64, scratch_operands = 0 : i64, tpu.core_type = #tpu.core_type<tc>, window_params = [{transform_indices = @transform_0, window_bounds = array<i64: 8, 32>}, {pipeline_mode = #tpu.pipeline_mode<synchronous>, transform_indices = @transform_1, window_bounds = array<i64: 32, 512>}, {pipeline_mode = #tpu.pipeline_mode<synchronous>, transform_indices = @transform_2, window_bounds = array<i64: 1, 512>}, {pipeline_mode = #tpu.pipeline_mode<synchronous>, transform_indices = @transform_3, window_bounds = array<i64: 512, 128>}, {pipeline_mode = #tpu.pipeline_mode<synchronous>, transform_indices = @transform_4, window_bounds = array<i64: 1, 128>}, {transform_indices = @transform_5, window_bounds = array<i64: 8, 128>}]} {
    %c0 = arith.constant 0 : index
    %c0_0 = arith.constant 0 : index
    %0 = vector.load %arg1[%c0, %c0_0] : memref<8x32xf32, #tpu.memory_space<vmem>>, vector<8x32xf32>
    %1 = arith.truncf %0 : vector<8x32xf32> to vector<8x32xbf16>
    %c0_1 = arith.constant 0 : index
    %c0_2 = arith.constant 0 : index
    %2 = vector.load %arg2[%c0_1, %c0_2] : memref<32x512xbf16, #tpu.memory_space<vmem>>, vector<32x512xbf16>
    %cst = arith.constant dense<0.000000e+00> : vector<8x512xf32>
    %3 = tpu.matmul %1, %2, %cst {dimension_numbers = #tpu.dot_dimension_numbers<[1], [0], [0], [1], [0, 0, 1, 1], [], []>} : vector<8x32xbf16>, vector<32x512xbf16>, vector<8x512xf32> -> vector<8x512xf32>
    %c0_3 = arith.constant 0 : index
    %c0_4 = arith.constant 0 : index
    %4 = vector.load %arg3[%c0_3, %c0_4] : memref<1x512xf32, #tpu.memory_space<vmem>>, vector<1x512xf32>
    %5 = vector.broadcast %4 : vector<1x512xf32> to vector<8x512xf32>
    %6 = arith.addf %3, %5 : vector<8x512xf32>
    %cst_5 = arith.constant 0.000000e+00 : f32
    %7 = vector.broadcast %cst_5 : f32 to vector<8x512xf32>
    %8 = arith.maximumf %6, %7 : vector<8x512xf32>
    %9 = arith.truncf %8 : vector<8x512xf32> to vector<8x512xbf16>
    %c0_6 = arith.constant 0 : index
    %c0_7 = arith.constant 0 : index
    %10 = vector.load %arg4[%c0_6, %c0_7] : memref<512x128xbf16, #tpu.memory_space<vmem>>, vector<512x128xbf16>
    %cst_8 = arith.constant dense<0.000000e+00> : vector<8x128xf32>
    %11 = tpu.matmul %9, %10, %cst_8 {dimension_numbers = #tpu.dot_dimension_numbers<[1], [0], [0], [1], [0, 0, 1, 1], [], []>} : vector<8x512xbf16>, vector<512x128xbf16>, vector<8x128xf32> -> vector<8x128xf32>
    %c0_9 = arith.constant 0 : index
    %c0_10 = arith.constant 0 : index
    %12 = vector.load %arg5[%c0_9, %c0_10] : memref<1x128xf32, #tpu.memory_space<vmem>>, vector<1x128xf32>
    %13 = vector.broadcast %12 : vector<1x128xf32> to vector<8x128xf32>
    %14 = arith.addf %11, %13 : vector<8x128xf32>
    %c0_11 = arith.constant 0 : index
    %c0_12 = arith.constant 0 : index
    %15 = vector.load %arg6[%c0_11, %c0_12] : memref<8x128xf32, #tpu.memory_space<vmem>>, vector<8x128xf32>
    tpu.vector_store %arg6[%c0_11, %c0_12], %14 {strides = array<i32>} : memref<8x128xf32, #tpu.memory_space<vmem>>, vector<8x128xf32>,
    return
  }
  func.func @transform_0(%arg0: i32) -> (i32, i32) {
    %c0_i32 = arith.constant 0 : i32
    %c0_i32_0 = arith.constant 0 : i32
    return %arg0, %c0_i32 : i32, i32
  }
  func.func @transform_1(%arg0: i32) -> (i32, i32) {
    %c0_i32 = arith.constant 0 : i32
    %c0_i32_0 = arith.constant 0 : i32
    %c0_i32_1 = arith.constant 0 : i32
    return %c0_i32, %c0_i32_0 : i32, i32
  }
  func.func @transform_2(%arg0: i32) -> (i32, i32) {
    %c0_i32 = arith.constant 0 : i32
    %c0_i32_0 = arith.constant 0 : i32
    %c0_i32_1 = arith.constant 0 : i32
    return %c0_i32, %c0_i32_0 : i32, i32
  }
  func.func @transform_3(%arg0: i32) -> (i32, i32) {
    %c0_i32 = arith.constant 0 : i32
    %c0_i32_0 = arith.constant 0 : i32
    %c0_i32_1 = arith.constant 0 : i32
    return %c0_i32, %c0_i32_0 : i32, i32
  }
  func.func @transform_4(%arg0: i32) -> (i32, i32) {
    %c0_i32 = arith.constant 0 : i32
    %c0_i32_0 = arith.constant 0 : i32
    %c0_i32_1 = arith.constant 0 : i32
    return %c0_i32, %c0_i32_0 : i32, i32
  }
  func.func @transform_5(%arg0: i32) -> (i32, i32) {
    %c0_i32 = arith.constant 0 : i32
    %c0_i32_0 = arith.constant 0 : i32
    return %arg0, %c0_i32 : i32, i32
  }
}

module attributes {stable_mosaic.version = 11 : i64} {
  func.func @_mlp_head_kernel(%arg0: i32, %arg1: memref<8x32xf32, #tpu.memory_space<vmem>>, %arg2: memref<32x512xbf16, #tpu.memory_space<vmem>>, %arg3: memref<1x512xf32, #tpu.memory_space<vmem>>, %arg4: memref<512x128xbf16, #tpu.memory_space<vmem>>, %arg5: memref<1x128xf32, #tpu.memory_space<vmem>>, %arg6: memref<8x128xf32, #tpu.memory_space<vmem>>) attributes {dimension_semantics = [#tpu.dimension_semantics<parallel>], iteration_bounds = array<i64: 1>, scalar_prefetch = 0 : i64, scratch_operands = 0 : i64, tpu.core_type = #tpu.core_type<tc>, window_params = [{transform_indices = @transform_0, window_bounds = array<i64: 8, 32>}, {pipeline_mode = #tpu.pipeline_mode<synchronous>, transform_indices = @transform_1, window_bounds = array<i64: 32, 512>}, {pipeline_mode = #tpu.pipeline_mode<synchronous>, transform_indices = @transform_2, window_bounds = array<i64: 1, 512>}, {pipeline_mode = #tpu.pipeline_mode<synchronous>, transform_indices = @transform_3, window_bounds = array<i64: 512, 128>}, {pipeline_mode = #tpu.pipeline_mode<synchronous>, transform_indices = @transform_4, window_bounds = array<i64: 1, 128>}, {transform_indices = @transform_5, window_bounds = array<i64: 8, 128>}]} {
    %c0 = arith.constant 0 : index
    %c0_0 = arith.constant 0 : index
    %0 = vector.load %arg1[%c0, %c0_0] : memref<8x32xf32, #tpu.memory_space<vmem>>, vector<8x32xf32>
    %1 = arith.truncf %0 : vector<8x32xf32> to vector<8x32xbf16>
    %c0_1 = arith.constant 0 : index
    %c0_2 = arith.constant 0 : index
    %2 = vector.load %arg2[%c0_1, %c0_2] : memref<32x512xbf16, #tpu.memory_space<vmem>>, vector<32x512xbf16>
    %cst = arith.constant dense<0.000000e+00> : vector<8x512xf32>
    %3 = tpu.matmul %1, %2, %cst {dimension_numbers = #tpu.dot_dimension_numbers<[1], [0], [0], [1], [0, 0, 1, 1], [], []>} : vector<8x32xbf16>, vector<32x512xbf16>, vector<8x512xf32> -> vector<8x512xf32>
    %c0_3 = arith.constant 0 : index
    %c0_4 = arith.constant 0 : index
    %4 = vector.load %arg3[%c0_3, %c0_4] : memref<1x512xf32, #tpu.memory_space<vmem>>, vector<1x512xf32>
    %5 = vector.broadcast %4 : vector<1x512xf32> to vector<8x512xf32>
    %6 = arith.addf %3, %5 : vector<8x512xf32>
    %cst_5 = arith.constant 0.000000e+00 : f32
    %7 = vector.broadcast %cst_5 : f32 to vector<8x512xf32>
    %8 = arith.maximumf %6, %7 : vector<8x512xf32>
    %9 = arith.truncf %8 : vector<8x512xf32> to vector<8x512xbf16>
    %c0_6 = arith.constant 0 : index
    %c0_7 = arith.constant 0 : index
    %10 = vector.load %arg4[%c0_6, %c0_7] : memref<512x128xbf16, #tpu.memory_space<vmem>>, vector<512x128xbf16>
    %cst_8 = arith.constant dense<0.000000e+00> : vector<8x128xf32>
    %11 = tpu.matmul %9, %10, %cst_8 {dimension_numbers = #tpu.dot_dimension_numbers<[1], [0], [0], [1], [0, 0, 1, 1], [], []>} : vector<8x512xbf16>, vector<512x128xbf16>, vector<8x128xf32> -> vector<8x128xf32>
    %c0_9 = arith.constant 0 : index
    %c0_10 = arith.constant 0 : index
    %12 = vector.load %arg5[%c0_9, %c0_10] : memref<1x128xf32, #tpu.memory_space<vmem>>, vector<1x128xf32>
    %13 = vector.broadcast %12 : vector<1x128xf32> to vector<8x128xf32>
    %14 = arith.addf %11, %13 : vector<8x128xf32>
    %c0_11 = arith.constant 0 : index
    %c0_12 = arith.constant 0 : index
    %15 = vector.load %arg6[%c0_11, %c0_12] : memref<8x128xf32, #tpu.memory_space<vmem>>, vector<8x128xf32>
    tpu.vector_store %arg6[%c0_11, %c0_12], %14 {strides = array<i32>} : memref<8x128xf32, #tpu.memory_space<vmem>>, vector<8x128xf32>,
    return
  }
  func.func @transform_0(%arg0: i32) -> (i32, i32) {
    %c0_i32 = arith.constant 0 : i32
    %c0_i32_0 = arith.constant 0 : i32
    return %arg0, %c0_i32 : i32, i32
  }
  func.func @transform_1(%arg0: i32) -> (i32, i32) {
    %c0_i32 = arith.constant 0 : i32
    %c0_i32_0 = arith.constant 0 : i32
    %c0_i32_1 = arith.constant 0 : i32
    return %c0_i32, %c0_i32_0 : i32, i32
  }
  func.func @transform_2(%arg0: i32) -> (i32, i32) {
    %c0_i32 = arith.constant 0 : i32
    %c0_i32_0 = arith.constant 0 : i32
    %c0_i32_1 = arith.constant 0 : i32
    return %c0_i32, %c0_i32_0 : i32, i32
  }
  func.func @transform_3(%arg0: i32) -> (i32, i32) {
    %c0_i32 = arith.constant 0 : i32
    %c0_i32_0 = arith.constant 0 : i32
    %c0_i32_1 = arith.constant 0 : i32
    return %c0_i32, %c0_i32_0 : i32, i32
  }
  func.func @transform_4(%arg0: i32) -> (i32, i32) {
    %c0_i32 = arith.constant 0 : i32
    %c0_i32_0 = arith.constant 0 : i32
    %c0_i32_1 = arith.constant 0 : i32
    return %c0_i32, %c0_i32_0 : i32, i32
  }
  func.func @transform_5(%arg0: i32) -> (i32, i32) {
    %c0_i32 = arith.constant 0 : i32
    %c0_i32_0 = arith.constant 0 : i32
    return %arg0, %c0_i32 : i32, i32
  }
}

</mosaic_0001>

<llo_original>
// kernel: tpu_custom_call.1
$region0: #{tpu_custom_call.1}
  #allocation0 [shape = 'u32[]', space=smem, size = 0x4, offset = 0x4, fixed_abs, tag = 'smem constant byte address 0x4 - core index']
  #allocation1 [shape = 'u32[144,128]{1,0:T(1,128)}', space=vmem, size = 0x12000, scoped, tag = 'internal scratch']
  %s0 = inlined_call_operand.hbm [shape: f32[8,32], index: 0, kind: input, shape index: {}]
  %s1 = inlined_call_operand.hbm [shape: bf16[32,512], index: 1, kind: input, shape index: {}]
  %s2 = inlined_call_operand.vmem [shape: f32[1,512], index: 2, kind: input, shape index: {}]
  %s3 = inlined_call_operand.hbm [shape: bf16[512,128], index: 3, kind: input, shape index: {}]
  %s4 = inlined_call_operand.vmem [shape: f32[1,128], index: 4, kind: input, shape index: {}]
  %s5 = inlined_call_operand.hbm [shape: f32[8,128], index: 5, kind: output, shape index: {}]
  %s6 = sld [smem:[#allocation0]]
  $region42: #{tpu_custom_call.1} parent=0
    _
  %s8 = ssub.s32 1, %s6
  %s9 = scalar_select 0, %s8, %s6
  $region1: #{tpu_custom_call.1} parent=0
    #allocation2 [shape = 'u8[4096]{0}', space=vmem, size = 0x1000, scoped, tag = 'input window, operand 0, single buffered']
    #allocation3 [shape = 's32[1]{0}', space=sflag, size = 0x4, scoped, tag = 'scoped memory for tpu_custom_call.1']
    #allocation4 [shape = 's32[1]{0}', space=sflag, size = 0x4, scoped, tag = 'scoped memory for tpu_custom_call.1']
    #allocation5 [shape = 'u8[32768]{0}', space=vmem, size = 0x8000, scoped, tag = 'input window, operand 1, single buffered']
    #allocation6 [shape = 's32[1]{0}', space=sflag, size = 0x4, scoped, tag = 'scoped memory for tpu_custom_call.1']
    #allocation7 [shape = 'u8[131072]{0}', space=vmem, size = 0x20000, scoped, tag = 'input window, operand 3, single buffered']
    #allocation8 [shape = 'u8[4096]{0}', space=vmem, size = 0x1000, scoped, tag = 'output window, operand 0, single buffered']
    %10 = vsyncpa [#allocation3], 0
    %11 = vsyncpa [#allocation6], 0
    %12 = vsyncpa [#allocation4], 0
    // Predicated region
    $region2: #{tpu_custom_call.1} parent=1 // pred_check
      _
    $region3: #{tpu_custom_call.1} parent=1 // pred_check_branch
      %14 = sbr.rel (0) target = $region5
    $region4: #{tpu_custom_call.1} parent=1 // pred_region
      %s16 = ssub.s32 128, 128
      %17 = vsyncadd [#allocation3], %s16
      %s19 = sshll.u32 [#allocation2], 4
      %s20 = int_to_ptr.vmem [resolvable:$true] %s19
      %22 = dma.hbm_to_vmem [thread:$0]  %s0, 128, %s20, [#allocation3]
    $region5: #{tpu_custom_call.1} parent=1 // pred_fallthru
      _
    // Predicated region
    $region6: #{tpu_custom_call.1} parent=1 // pred_check
      _
    $region7: #{tpu_custom_call.1} parent=1 // pred_check_branch
      %24 = sbr.rel (0) target = $region9
    $region8: #{tpu_custom_call.1} parent=1 // pred_region
      %s26 = ssub.s32 1024, 1024
      %27 = vsyncadd [#allocation6], %s26
      %s28 = sshll.u32 [#allocation5], 4
      %s29 = int_to_ptr.vmem [resolvable:$true] %s28
      %34 = dma.hbm_to_vmem [thread:$0]  %s1, 1024, %s29, [#allocation6], 256, 256, 16
    $region9: #{tpu_custom_call.1} parent=1 // pred_fallthru
      _
    // Predicated region
    $region10: #{tpu_custom_call.1} parent=1 // pred_check
      _
    $region11: #{tpu_custom_call.1} parent=1 // pred_check_branch
      %36 = sbr.rel (0) target = $region13
    $region12: #{tpu_custom_call.1} parent=1 // pred_region
      _
    $region13: #{tpu_custom_call.1} parent=1 // pred_fallthru
      _
    // Predicated region
    $region14: #{tpu_custom_call.1} parent=1 // pred_check
      _
    $region15: #{tpu_custom_call.1} parent=1 // pred_check_branch
      %38 = sbr.rel (0) target = $region17
    $region16: #{tpu_custom_call.1} parent=1 // pred_region
      %s40 = ssub.s32 4096, 4096
      %41 = vsyncadd [#allocation6], %s40
      %s42 = sshll.u32 [#allocation7], 4
      %s43 = int_to_ptr.vmem [resolvable:$true] %s42
      %48 = dma.hbm_to_vmem [thread:$0]  %s3, 4096, %s43, [#allocation6], 64, 64, 4
    $region17: #{tpu_custom_call.1} parent=1 // pred_fallthru
      _
    // Predicated region
    $region18: #{tpu_custom_call.1} parent=1 // pred_check
      _
    $region19: #{tpu_custom_call.1} parent=1 // pred_check_branch
      %50 = sbr.rel (0) target = $region21
    $region20: #{tpu_custom_call.1} parent=1 // pred_region
      _
    $region21: #{tpu_custom_call.1} parent=1 // pred_fallthru
      _
    // Predicated region
    $region22: #{tpu_custom_call.1} parent=1 // pred_check
      _
    $region23: #{tpu_custom_call.1} parent=1 // pred_check_branch
      %52 = sbr.rel (0) target = $region25
    $region24: #{tpu_custom_call.1} parent=1 // pred_region
      %53 = dma.done [#allocation3], 128
    $region25: #{tpu_custom_call.1} parent=1 // pred_fallthru
      _
    // Predicated region
    $region26: #{tpu_custom_call.1} parent=1 // pred_check
      _
    $region27: #{tpu_custom_call.1} parent=1 // pred_check_branch
      %55 = sbr.rel (0) target = $region29
    $region28: #{tpu_custom_call.1} parent=1 // pred_region
      %56 = dma.done [#allocation6], 1024
    $region29: #{tpu_custom_call.1} parent=1 // pred_fallthru
      _
    // Predicated region
    $region30: #{tpu_custom_call.1} parent=1 // pred_check
      _
    $region31: #{tpu_custom_call.1} parent=1 // pred_check_branch
      %58 = sbr.rel (0) target = $region33
    $region32: #{tpu_custom_call.1} parent=1 // pred_region
      %59 = dma.done [#allocation6], 4096
    $region33: #{tpu_custom_call.1} parent=1 // pred_fallthru
      _
    %v61 = vld [vmem:[#allocation2] sm:$0xff]
    %v62 = vpack.c.bf16 %v61, %v61
    %v63 = vld [vmem:[#allocation5] sm:$0xff]
    %v64 = vld [vmem:[#allocation5 + $0x8] sm:$0xff]
    %v65 = vld [vmem:[#allocation5 + $0x10] sm:$0xff]
    %v66 = vld [vmem:[#allocation5 + $0x18] sm:$0xff]
    %v67 = vld [vmem:[#allocation5 + $0x20] sm:$0xff]
    %v68 = vld [vmem:[#allocation5 + $0x28] sm:$0xff]
    %v69 = vld [vmem:[#allocation5 + $0x30] sm:$0xff]
    %v70 = vld [vmem:[#allocation5 + $0x38] sm:$0xff]
    %v71 = vld [vmem:[%s2] sm:$0xf]
    %v73 = vlaneseq
    %v74 = vshrl.u32 %v73, 7
    %v75 = vsub.s32 0, %v74
    %v76 = vrot.slane %v71, %v75
    %v77 = vlaneseq
    %v78 = vshrl.u32 %v77, 7
    %v79 = vsub.s32 1, %v78
    %v80 = vrot.slane %v71, %v79
    %v81 = vlaneseq
    %v82 = vshrl.u32 %v81, 7
    %v83 = vsub.s32 2, %v82
    %v84 = vrot.slane %v71, %v83
    %v85 = vlaneseq
    %v86 = vshrl.u32 %v85, 7
    %v87 = vsub.s32 3, %v86
    %v88 = vrot.slane %v71, %v87
    %v101 = vunpack.c.l.b16 %v63
    %v102 = vunpack.c.h.b16 %v63
    %v103 = vunpack.c.l.b16 %v64
    %v104 = vunpack.c.h.b16 %v64
    %v105 = vunpack.c.l.b16 %v65
    %v106 = vunpack.c.h.b16 %v65
    %v107 = vunpack.c.l.b16 %v66
    %v108 = vunpack.c.h.b16 %v66
    %v109 = vunpack.c.l.b16 %v67
    %v110 = vunpack.c.h.b16 %v67
    %v111 = vunpack.c.l.b16 %v68
    %v112 = vunpack.c.h.b16 %v68
    %v113 = vunpack.c.l.b16 %v69
    %v114 = vunpack.c.h.b16 %v69
    %v115 = vunpack.c.l.b16 %v70
    %v116 = vunpack.c.h.b16 %v70
    %v117 = vpack.c.b16 %v105, %v101
    %v118 = vpack.c.b16 %v106, %v102
    %v119 = vpack.c.b16 %v107, %v103
    %v120 = vpack.c.b16 %v108, %v104
    %v121 = vpack.c.b16 %v113, %v109
    %v122 = vpack.c.b16 %v114, %v110
    %v123 = vpack.c.b16 %v115, %v111
    %v124 = vpack.c.b16 %v116, %v112
    %vm133 = vcmask 261120
    %v135 = vsel %vm133, %v62, 0
    %137 = vmatprep.subr.bf16.mxu0 %v118
    %138 = vmatpush1.bf16.msra.mxu0 %v117
    %139 = vmatprep.subr.bf16.mxu0 %v122
    %140 = vmatpush1.bf16.msra.mxu0 %v121
    %141 = vmatprep.subr.bf16.mxu0 0
    %142 = vmatpush1.bf16.msra.mxu0 0
    %143 = vmatprep.subr.bf16.mxu0 0
    %144 = vmatpush1.bf16.msra.mxu0 0
    %145 = vmatprep.subr.bf16.mxu0 0
    %146 = vmatpush1.bf16.msra.mxu0 0
    %147 = vmatprep.subr.bf16.mxu0 0
    %148 = vmatpush1.bf16.msra.mxu0 0
    %149 = vmatprep.subr.bf16.mxu0 0
    %150 = vmatpush1.bf16.msra.mxu0 0
    %151 = vmatprep.subr.bf16.mxu0 0
    %152 = vmatpush1.bf16.msra.mxu0 0
    %153 = vmatprep.subr.bf16.mxu0 0
    %154 = vmatpush1.bf16.msra.mxu0 0
    %155 = vmatprep.subr.bf16.mxu0 0
    %156 = vmatpush1.bf16.msra.mxu0 0
    %157 = vmatprep.subr.bf16.mxu0 0
    %158 = vmatpush1.bf16.msra.mxu0 0
    %159 = vmatprep.subr.bf16.mxu0 0
    %160 = vmatpush1.bf16.msra.mxu0 0
    %161 = vmatprep.subr.bf16.mxu0 0
    %162 = vmatpush1.bf16.msra.mxu0 0
    %163 = vmatprep.subr.bf16.mxu0 0
    %164 = vmatpush1.bf16.msra.mxu0 0
    %165 = vmatprep.subr.bf16.mxu0 0
    %166 = vmatpush1.bf16.msra.mxu0 0
    %167 = vmatprep.subr.bf16.mxu0 0
    %168 = vmatpush1.bf16.msra.mxu0 0
    %169 = vmatprep.mubr.bf16.mxu0 0
    %170 = vmatmul.mubr.bf16.gmra.mrb[0].mxu0 %v135
    %v171 = vpop.f32.mrb[0].mxu0
    %v172 = vadd.f32 %v76, %v171
    %v173 = vpop.f32.mrb[0].mxu0
    %v174 = vadd.f32 %v80, %v173
    %v175 = vpop.f32.mrb[0].mxu0
    %v176 = vpop.f32.mrb[0].mxu0
    %177 = vdwg.mxu0
    %178 = vmatprep.subr.bf16.mxu0 %v120
    %179 = vmatpush1.bf16.msra.mxu0 %v119
    %180 = vmatprep.subr.bf16.mxu0 %v124
    %181 = vmatpush1.bf16.msra.mxu0 %v123
    %182 = vmatprep.subr.bf16.mxu0 0
    %183 = vmatpush1.bf16.msra.mxu0 0
    %184 = vmatprep.subr.bf16.mxu0 0
    %185 = vmatpush1.bf16.msra.mxu0 0
    %186 = vmatprep.subr.bf16.mxu0 0
    %187 = vmatpush1.bf16.msra.mxu0 0
    %188 = vmatprep.subr.bf16.mxu0 0
    %189 = vmatpush1.bf16.msra.mxu0 0
    %190 = vmatprep.subr.bf16.mxu0 0
    %191 = vmatpush1.bf16.msra.mxu0 0
    %192 = vmatprep.subr.bf16.mxu0 0
    %193 = vmatpush1.bf16.msra.mxu0 0
    %194 = vmatprep.subr.bf16.mxu0 0
    %195 = vmatpush1.bf16.msra.mxu0 0
    %196 = vmatprep.subr.bf16.mxu0 0
    %197 = vmatpush1.bf16.msra.mxu0 0
    %198 = vmatprep.subr.bf16.mxu0 0
    %199 = vmatpush1.bf16.msra.mxu0 0
    %200 = vmatprep.subr.bf16.mxu0 0
    %201 = vmatpush1.bf16.msra.mxu0 0
    %202 = vmatprep.subr.bf16.mxu0 0
    %203 = vmatpush1.bf16.msra.mxu0 0
    %204 = vmatprep.subr.bf16.mxu0 0
    %205 = vmatpush1.bf16.msra.mxu0 0
    %206 = vmatprep.subr.bf16.mxu0 0
    %207 = vmatpush1.bf16.msra.mxu0 0
    %208 = vmatprep.subr.bf16.mxu0 0
    %209 = vmatpush1.bf16.msra.mxu0 0
    %210 = vmatprep.mubr.bf16.mxu0 0
    %211 = vmatmul.mubr.bf16.gmra.mrb[0].mxu0 %v135
    %v212 = vpop.f32.mrb[0].mxu0
    %v213 = vadd.f32 %v84, %v212
    %v214 = vpop.f32.mrb[0].mxu0
    %v215 = vadd.f32 %v88, %v214
    %v216 = vpop.f32.mrb[0].mxu0
    %v217 = vpop.f32.mrb[0].mxu0
    %218 = vdwg.mxu0
    %v219 = vmax.f32 %v172, 0.0
    %v220 = vmax.f32 %v174, 0.0
    %v221 = vmax.f32 %v213, 0.0
    %v222 = vmax.f32 %v215, 0.0
    %v223 = vpack.c.bf16 %v219, %v219
    %v224 = vpack.c.bf16 %v220, %v220
    %v225 = vpack.c.bf16 %v221, %v221
    %v226 = vpack.c.bf16 %v222, %v222
    %v227 = vld [vmem:[#allocation7] sm:$0xf]
    %v228 = vld [vmem:[#allocation7 + $0x4] sm:$0xf]
    %v229 = vld [vmem:[#allocation7 + $0x8] sm:$0xf]
    %v230 = vld [vmem:[#allocation7 + $0xc] sm:$0xf]
    %v231 = vld [vmem:[#allocation7 + $0x10] sm:$0xf]
    %v232 = vld [vmem:[#allocation7 + $0x14] sm:$0xf]
    %v233 = vld [vmem:[#allocation7 + $0x18] sm:$0xf]
    %v234 = vld [vmem:[#allocation7 + $0x1c] sm:$0xf]
    %v235 = vld [vmem:[#allocation7 + $0x20] sm:$0xf]
    %v236 = vld [vmem:[#allocation7 + $0x24] sm:$0xf]
    %v237 = vld [vmem:[#allocation7 + $0x28] sm:$0xf]
    %v238 = vld [vmem:[#allocation7 + $0x2c] sm:$0xf]
    %v239 = vld [vmem:[#allocation7 + $0x30] sm:$0xf]
    %v240 = vld [vmem:[#allocation7 + $0x34] sm:$0xf]
    %v241 = vld [vmem:[#allocation7 + $0x38] sm:$0xf]
    %v242 = vld [vmem:[#allocation7 + $0x3c] sm:$0xf]
    %v243 = vld [vmem:[#allocation7 + $0x40] sm:$0xf]
    %v244 = vld [vmem:[#allocation7 + $0x44] sm:$0xf]
    %v245 = vld [vmem:[#allocation7 + $0x48] sm:$0xf]
    %v246 = vld [vmem:[#allocation7 + $0x4c] sm:$0xf]
    %v247 = vld [vmem:[#allocation7 + $0x50] sm:$0xf]
    %v248 = vld [vmem:[#allocation7 + $0x54] sm:$0xf]
    %v249 = vld [vmem:[#allocation7 + $0x58] sm:$0xf]
    %v250 = vld [vmem:[#allocation7 + $0x5c] sm:$0xf]
    %v251 = vld [vmem:[#allocation7 + $0x60] sm:$0xf]
    %v252 = vld [vmem:[#allocation7 + $0x64] sm:$0xf]
    %v253 = vld [vmem:[#allocation7 + $0x68] sm:$0xf]
    %v254 = vld [vmem:[#allocation7 + $0x6c] sm:$0xf]
    %v255 = vld [vmem:[#allocation7 + $0x70] sm:$0xf]
    %v256 = vld [vmem:[#allocation7 + $0x74] sm:$0xf]
    %v257 = vld [vmem:[#allocation7 + $0x78] sm:$0xf]
    %v258 = vld [vmem:[#allocation7 + $0x7c] sm:$0xf]
    %v259 = vld [vmem:[#allocation7 + $0x80] sm:$0xf]
    %v260 = vld [vmem:[#allocation7 + $0x84] sm:$0xf]
    %v261 = vld [vmem:[#allocation7 + $0x88] sm:$0xf]
    %v262 = vld [vmem:[#allocation7 + $0x8c] sm:$0xf]
    %v263 = vld [vmem:[#allocation7 + $0x90] sm:$0xf]
    %v264 = vld [vmem:[#allocation7 + $0x94] sm:$0xf]
    %v265 = vld [vmem:[#allocation7 + $0x98] sm:$0xf]
    %v266 = vld [vmem:[#allocation7 + $0x9c] sm:$0xf]
    %v267 = vld [vmem:[#allocation7 + $0xa0] sm:$0xf]
    %v268 = vld [vmem:[#allocation7 + $0xa4] sm:$0xf]
    %v269 = vld [vmem:[#allocation7 + $0xa8] sm:$0xf]
    %v270 = vld [vmem:[#allocation7 + $0xac] sm:$0xf]
    %v271 = vld [vmem:[#allocation7 + $0xb0] sm:$0xf]
    %v272 = vld [vmem:[#allocation7 + $0xb4] sm:$0xf]
    %v273 = vld [vmem:[#allocation7 + $0xb8] sm:$0xf]
    %v274 = vld [vmem:[#allocation7 + $0xbc] sm:$0xf]
    %v275 = vld [vmem:[#allocation7 + $0xc0] sm:$0xf]
    %v276 = vld [vmem:[#allocation7 + $0xc4] sm:$0xf]
    %v277 = vld [vmem:[#allocation7 + $0xc8] sm:$0xf]
    %v278 = vld [vmem:[#allocation7 + $0xcc] sm:$0xf]
    %v279 = vld [vmem:[#allocation7 + $0xd0] sm:$0xf]
    %v280 = vld [vmem:[#allocation7 + $0xd4] sm:$0xf]
    %v281 = vld [vmem:[#allocation7 + $0xd8] sm:$0xf]
    %v282 = vld [vmem:[#allocation7 + $0xdc] sm:$0xf]
    %v283 = vld [vmem:[#allocation7 + $0xe0] sm:$0xf]
    %v284 = vld [vmem:[#allocation7 + $0xe4] sm:$0xf]
    %v285 = vld [vmem:[#allocation7 + $0xe8] sm:$0xf]
    %v286 = vld [vmem:[#allocation7 + $0xec] sm:$0xf]
    %v287 = vld [vmem:[#allocation7 + $0xf0] sm:$0xf]
    %v288 = vld [vmem:[#allocation7 + $0xf4] sm:$0xf]
    %v289 = vld [vmem:[#allocation7 + $0xf8] sm:$0xf]
    %v290 = vld [vmem:[#allocation7 + $0xfc] sm:$0xf]
    %v291 = vld [vmem:[%s4] sm:$0x1]
    %v293 = vlaneseq
    %v294 = vshrl.u32 %v293, 7
    %v295 = vsub.s32 0, %v294
    %v296 = vrot.slane %v291, %v295
    %v362 = vunpack.c.l.b16 %v227
    %v363 = vunpack.c.l.b16 %v228
    %v364 = vunpack.c.l.b16 %v229
    %v365 = vunpack.c.l.b16 %v230
    %v366 = vunpack.c.l.b16 %v231
    %v367 = vunpack.c.l.b16 %v232
    %v368 = vunpack.c.l.b16 %v233
    %v369 = vunpack.c.l.b16 %v234
    %v370 = vunpack.c.l.b16 %v235
    %v371 = vunpack.c.l.b16 %v236
    %v372 = vunpack.c.l.b16 %v237
    %v373 = vunpack.c.l.b16 %v238
    %v374 = vunpack.c.l.b16 %v239
    %v375 = vunpack.c.l.b16 %v240
    %v376 = vunpack.c.l.b16 %v241
    %v377 = vunpack.c.l.b16 %v242
    %v378 = vunpack.c.l.b16 %v243
    %v379 = vunpack.c.l.b16 %v244
    %v380 = vunpack.c.l.b16 %v245
    %v381 = vunpack.c.l.b16 %v246
    %v382 = vunpack.c.l.b16 %v247
    %v383 = vunpack.c.l.b16 %v248
    %v384 = vunpack.c.l.b16 %v249
    %v385 = vunpack.c.l.b16 %v250
    %v386 = vunpack.c.l.b16 %v251
    %v387 = vunpack.c.l.b16 %v252
    %v388 = vunpack.c.l.b16 %v253
    %v389 = vunpack.c.l.b16 %v254
    %v390 = vunpack.c.l.b16 %v255
    %v391 = vunpack.c.l.b16 %v256
    %v392 = vunpack.c.l.b16 %v257
    %v393 = vunpack.c.l.b16 %v258
    %v394 = vunpack.c.l.b16 %v259
    %v395 = vunpack.c.l.b16 %v260
    %v396 = vunpack.c.l.b16 %v261
    %v397 = vunpack.c.l.b16 %v262
    %v398 = vunpack.c.l.b16 %v263
    %v399 = vunpack.c.l.b16 %v264
    %v400 = vunpack.c.l.b16 %v265
    %v401 = vunpack.c.l.b16 %v266
    %v402 = vunpack.c.l.b16 %v267
    %v403 = vunpack.c.l.b16 %v268
    %v404 = vunpack.c.l.b16 %v269
    %v405 = vunpack.c.l.b16 %v270
    %v406 = vunpack.c.l.b16 %v271
    %v407 = vunpack.c.l.b16 %v272
    %v408 = vunpack.c.l.b16 %v273
    %v409 = vunpack.c.l.b16 %v274
    %v410 = vunpack.c.l.b16 %v275
    %v411 = vunpack.c.l.b16 %v276
    %v412 = vunpack.c.l.b16 %v277
    %v413 = vunpack.c.l.b16 %v278
    %v414 = vunpack.c.l.b16 %v279
    %v415 = vunpack.c.l.b16 %v280
    %v416 = vunpack.c.l.b16 %v281
    %v417 = vunpack.c.l.b16 %v282
    %v418 = vunpack.c.l.b16 %v283
    %v419 = vunpack.c.l.b16 %v284
    %v420 = vunpack.c.l.b16 %v285
    %v421 = vunpack.c.l.b16 %v286
    %v422 = vunpack.c.l.b16 %v287
    %v423 = vunpack.c.l.b16 %v288
    %v424 = vunpack.c.l.b16 %v289
    %v425 = vunpack.c.l.b16 %v290
    %v426 = vpack.c.b16 %v363, %v362
    %v427 = vpack.c.b16 %v365, %v364
    %v428 = vpack.c.b16 %v367, %v366
    %v429 = vpack.c.b16 %v369, %v368
    %v430 = vpack.c.b16 %v371, %v370
    %v431 = vpack.c.b16 %v373, %v372
    %v432 = vpack.c.b16 %v375, %v374
    %v433 = vpack.c.b16 %v377, %v376
    %v434 = vpack.c.b16 %v379, %v378
    %v435 = vpack.c.b16 %v381, %v380
    %v436 = vpack.c.b16 %v383, %v382
    %v437 = vpack.c.b16 %v385, %v384
    %v438 = vpack.c.b16 %v387, %v386
    %v439 = vpack.c.b16 %v389, %v388
    %v440 = vpack.c.b16 %v391, %v390
    %v441 = vpack.c.b16 %v393, %v392
    %v442 = vpack.c.b16 %v395, %v394
    %v443 = vpack.c.b16 %v397, %v396
    %v444 = vpack.c.b16 %v399, %v398
    %v445 = vpack.c.b16 %v401, %v400
    %v446 = vpack.c.b16 %v403, %v402
    %v447 = vpack.c.b16 %v405, %v404
    %v448 = vpack.c.b16 %v407, %v406
    %v449 = vpack.c.b16 %v409, %v408
    %v450 = vpack.c.b16 %v411, %v410
    %v451 = vpack.c.b16 %v413, %v412
    %v452 = vpack.c.b16 %v415, %v414
    %v453 = vpack.c.b16 %v417, %v416
    %v454 = vpack.c.b16 %v419, %v418
    %v455 = vpack.c.b16 %v421, %v420
    %v456 = vpack.c.b16 %v423, %v422
    %v457 = vpack.c.b16 %v425, %v424
    %490 = vmatprep.subr.bf16.mxu0 0
    %491 = vmatpush1.bf16.msra.mxu0 %v426
    %492 = vmatprep.subr.bf16.mxu0 0
    %493 = vmatpush1.bf16.msra.mxu0 %v427
    %494 = vmatprep.subr.bf16.mxu0 0
    %495 = vmatpush1.bf16.msra.mxu0 %v428
    %496 = vmatprep.subr.bf16.mxu0 0
    %497 = vmatpush1.bf16.msra.mxu0 %v429
    %498 = vmatprep.subr.bf16.mxu0 0
    %499 = vmatpush1.bf16.msra.mxu0 %v430
    %500 = vmatprep.subr.bf16.mxu0 0
    %501 = vmatpush1.bf16.msra.mxu0 %v431
    %502 = vmatprep.subr.bf16.mxu0 0
    %503 = vmatpush1.bf16.msra.mxu0 %v432
    %504 = vmatprep.subr.bf16.mxu0 0
    %505 = vmatpush1.bf16.msra.mxu0 %v433
    %506 = vmatprep.subr.bf16.mxu0 0
    %507 = vmatpush1.bf16.msra.mxu0 %v434
    %508 = vmatprep.subr.bf16.mxu0 0
    %509 = vmatpush1.bf16.msra.mxu0 %v435
    %510 = vmatprep.subr.bf16.mxu0 0
    %511 = vmatpush1.bf16.msra.mxu0 %v436
    %512 = vmatprep.subr.bf16.mxu0 0
    %513 = vmatpush1.bf16.msra.mxu0 %v437
    %514 = vmatprep.subr.bf16.mxu0 0
    %515 = vmatpush1.bf16.msra.mxu0 %v438
    %516 = vmatprep.subr.bf16.mxu0 0
    %517 = vmatpush1.bf16.msra.mxu0 %v439
    %518 = vmatprep.subr.bf16.mxu0 0
    %519 = vmatpush1.bf16.msra.mxu0 %v440
    %520 = vmatprep.subr.bf16.mxu0 0
    %521 = vmatpush1.bf16.msra.mxu0 %v441
    %522 = vmatprep.mubr.bf16.mxu0 %v224
    %523 = vmatmul.mubr.bf16.gmra.mrb[0].mxu0 %v223
    %v524 = vpop.f32.mrb[0].mxu0
    %v525 = vadd.f32 %v296, %v524
    %v526 = vpop.f32.mrb[0].mxu0
    %v527 = vpop.f32.mrb[0].mxu0
    %v528 = vpop.f32.mrb[0].mxu0
    %529 = vdwg.mxu0
    %530 = vmatprep.subr.bf16.mxu0 0
    %531 = vmatpush1.bf16.msra.mxu0 %v442
    %532 = vmatprep.subr.bf16.mxu0 0
    %533 = vmatpush1.bf16.msra.mxu0 %v443
    %534 = vmatprep.subr.bf16.mxu0 0
    %535 = vmatpush1.bf16.msra.mxu0 %v444
    %536 = vmatprep.subr.bf16.mxu0 0
    %537 = vmatpush1.bf16.msra.mxu0 %v445
    %538 = vmatprep.subr.bf16.mxu0 0
    %539 = vmatpush1.bf16.msra.mxu0 %v446
    %540 = vmatprep.subr.bf16.mxu0 0
    %541 = vmatpush1.bf16.msra.mxu0 %v447
    %542 = vmatprep.subr.bf16.mxu0 0
    %543 = vmatpush1.bf16.msra.mxu0 %v448
    %544 = vmatprep.subr.bf16.mxu0 0
    %545 = vmatpush1.bf16.msra.mxu0 %v449
    %546 = vmatprep.subr.bf16.mxu0 0
    %547 = vmatpush1.bf16.msra.mxu0 %v450
    %548 = vmatprep.subr.bf16.mxu0 0
    %549 = vmatpush1.bf16.msra.mxu0 %v451
    %550 = vmatprep.subr.bf16.mxu0 0
    %551 = vmatpush1.bf16.msra.mxu0 %v452
    %552 = vmatprep.subr.bf16.mxu0 0
    %553 = vmatpush1.bf16.msra.mxu0 %v453
    %554 = vmatprep.subr.bf16.mxu0 0
    %555 = vmatpush1.bf16.msra.mxu0 %v454
    %556 = vmatprep.subr.bf16.mxu0 0
    %557 = vmatpush1.bf16.msra.mxu0 %v455
    %558 = vmatprep.subr.bf16.mxu0 0
    %559 = vmatpush1.bf16.msra.mxu0 %v456
    %560 = vmatprep.subr.bf16.mxu0 0
    %561 = vmatpush1.bf16.msra.mxu0 %v457
    %562 = vmatprep.mubr.bf16.mxu0 %v226
    %563 = vmatmul.mubr.bf16.gmra.mrb[0].mxu0 %v225
    %v564 = vpop.f32.mrb[0].mxu0
    %v565 = vadd.f32 %v525, %v564
    %v566 = vpop.f32.mrb[0].mxu0
    %v567 = vpop.f32.mrb[0].mxu0
    %v568 = vpop.f32.mrb[0].mxu0
    %569 = vdwg.mxu0
    %570 = vst [vmem:[#allocation8] sm:$0xff] %v565
    // Predicated region
    $region34: #{tpu_custom_call.1} parent=1 // pred_check
      _
    $region35: #{tpu_custom_call.1} parent=1 // pred_check_branch
      %572 = sbr.rel (0) target = $region37
    $region36: #{tpu_custom_call.1} parent=1 // pred_region
      %s574 = ssub.s32 128, 128
      %575 = vsyncadd [#allocation4], %s574
      %s577 = sshll.u32 [#allocation8], 4
      %s578 = int_to_ptr.vmem [resolvable:$true] %s577
      %580 = dma.vmem_to_hbm [thread:$0]  %s578, 128, %s5, [#allocation4]
    $region37: #{tpu_custom_call.1} parent=1 // pred_fallthru
      _
    // Predicated region
    $region38: #{tpu_custom_call.1} parent=1 // pred_check
      _
    $region39: #{tpu_custom_call.1} parent=1 // pred_check_branch
      %582 = sbr.rel (0) target = $region41
    $region40: #{tpu_custom_call.1} parent=1 // pred_region
      %583 = dma.done [#allocation4], 128
    $region41: #{tpu_custom_call.1} parent=1 // pred_fallthru
      _
    %584 = vsyncpa [#allocation3], 1
    %585 = vsyncpa [#allocation6], 1
    %586 = vsyncpa [#allocation4], 1

// kernel: tpu_custom_call.1
$region0: #{tpu_custom_call.1}
  #allocation0 [shape = 'u32[]', space=smem, size = 0x4, offset = 0x4, fixed_abs, tag = 'smem constant byte address 0x4 - core index']
  #allocation1 [shape = 'u32[144,128]{1,0:T(1,128)}', space=vmem, size = 0x12000, scoped, tag = 'internal scratch']
  %s0 = inlined_call_operand.hbm [shape: f32[8,32], index: 0, kind: input, shape index: {}]
  %s1 = inlined_call_operand.hbm [shape: bf16[32,512], index: 1, kind: input, shape index: {}]
  %s2 = inlined_call_operand.vmem [shape: f32[1,512], index: 2, kind: input, shape index: {}]
  %s3 = inlined_call_operand.hbm [shape: bf16[512,128], index: 3, kind: input, shape index: {}]
  %s4 = inlined_call_operand.vmem [shape: f32[1,128], index: 4, kind: input, shape index: {}]
  %s5 = inlined_call_operand.hbm [shape: f32[8,128], index: 5, kind: output, shape index: {}]
  %s6 = sld [smem:[#allocation0]]
  $region42: #{tpu_custom_call.1} parent=0
    _
  %s8 = ssub.s32 1, %s6
  %s9 = scalar_select 0, %s8, %s6
  $region1: #{tpu_custom_call.1} parent=0
    #allocation2 [shape = 'u8[4096]{0}', space=vmem, size = 0x1000, scoped, tag = 'input window, operand 0, single buffered']
    #allocation3 [shape = 's32[1]{0}', space=sflag, size = 0x4, scoped, tag = 'scoped memory for tpu_custom_call.1']
    #allocation4 [shape = 's32[1]{0}', space=sflag, size = 0x4, scoped, tag = 'scoped memory for tpu_custom_call.1']
    #allocation5 [shape = 'u8[32768]{0}', space=vmem, size = 0x8000, scoped, tag = 'input window, operand 1, single buffered']
    #allocation6 [shape = 's32[1]{0}', space=sflag, size = 0x4, scoped, tag = 'scoped memory for tpu_custom_call.1']
    #allocation7 [shape = 'u8[131072]{0}', space=vmem, size = 0x20000, scoped, tag = 'input window, operand 3, single buffered']
    #allocation8 [shape = 'u8[4096]{0}', space=vmem, size = 0x1000, scoped, tag = 'output window, operand 0, single buffered']
    %10 = vsyncpa [#allocation3], 0
    %11 = vsyncpa [#allocation6], 0
    %12 = vsyncpa [#allocation4], 0
    // Predicated region
    $region2: #{tpu_custom_call.1} parent=1 // pred_check
      _
    $region3: #{tpu_custom_call.1} parent=1 // pred_check_branch
      %14 = sbr.rel (0) target = $region5
    $region4: #{tpu_custom_call.1} parent=1 // pred_region
      %s16 = ssub.s32 128, 128
      %17 = vsyncadd [#allocation3], %s16
      %s19 = sshll.u32 [#allocation2], 4
      %s20 = int_to_ptr.vmem [resolvable:$true] %s19
      %22 = dma.hbm_to_vmem [thread:$0]  %s0, 128, %s20, [#allocation3]
    $region5: #{tpu_custom_call.1} parent=1 // pred_fallthru
      _
    // Predicated region
    $region6: #{tpu_custom_call.1} parent=1 // pred_check
      _
    $region7: #{tpu_custom_call.1} parent=1 // pred_check_branch
      %24 = sbr.rel (0) target = $region9
    $region8: #{tpu_custom_call.1} parent=1 // pred_region
      %s26 = ssub.s32 1024, 1024
      %27 = vsyncadd [#allocation6], %s26
      %s28 = sshll.u32 [#allocation5], 4
      %s29 = int_to_ptr.vmem [resolvable:$true] %s28
      %34 = dma.hbm_to_vmem [thread:$0]  %s1, 1024, %s29, [#allocation6], 256, 256, 16
    $region9: #{tpu_custom_call.1} parent=1 // pred_fallthru
      _
    // Predicated region
    $region10: #{tpu_custom_call.1} parent=1 // pred_check
      _
    $region11: #{tpu_custom_call.1} parent=1 // pred_check_branch
      %36 = sbr.rel (0) target = $region13
    $region12: #{tpu_custom_call.1} parent=1 // pred_region
      _
    $region13: #{tpu_custom_call.1} parent=1 // pred_fallthru
      _
    // Predicated region
    $region14: #{tpu_custom_call.1} parent=1 // pred_check
      _
    $region15: #{tpu_custom_call.1} parent=1 // pred_check_branch
      %38 = sbr.rel (0) target = $region17
    $region16: #{tpu_custom_call.1} parent=1 // pred_region
      %s40 = ssub.s32 4096, 4096
      %41 = vsyncadd [#allocation6], %s40
      %s42 = sshll.u32 [#allocation7], 4
      %s43 = int_to_ptr.vmem [resolvable:$true] %s42
      %48 = dma.hbm_to_vmem [thread:$0]  %s3, 4096, %s43, [#allocation6], 64, 64, 4
    $region17: #{tpu_custom_call.1} parent=1 // pred_fallthru
      _
    // Predicated region
    $region18: #{tpu_custom_call.1} parent=1 // pred_check
      _
    $region19: #{tpu_custom_call.1} parent=1 // pred_check_branch
      %50 = sbr.rel (0) target = $region21
    $region20: #{tpu_custom_call.1} parent=1 // pred_region
      _
    $region21: #{tpu_custom_call.1} parent=1 // pred_fallthru
      _
    // Predicated region
    $region22: #{tpu_custom_call.1} parent=1 // pred_check
      _
    $region23: #{tpu_custom_call.1} parent=1 // pred_check_branch
      %52 = sbr.rel (0) target = $region25
    $region24: #{tpu_custom_call.1} parent=1 // pred_region
      %53 = dma.done [#allocation3], 128
    $region25: #{tpu_custom_call.1} parent=1 // pred_fallthru
      _
    // Predicated region
    $region26: #{tpu_custom_call.1} parent=1 // pred_check
      _
    $region27: #{tpu_custom_call.1} parent=1 // pred_check_branch
      %55 = sbr.rel (0) target = $region29
    $region28: #{tpu_custom_call.1} parent=1 // pred_region
      %56 = dma.done [#allocation6], 1024
    $region29: #{tpu_custom_call.1} parent=1 // pred_fallthru
      _
    // Predicated region
    $region30: #{tpu_custom_call.1} parent=1 // pred_check
      _
    $region31: #{tpu_custom_call.1} parent=1 // pred_check_branch
      %58 = sbr.rel (0) target = $region33
    $region32: #{tpu_custom_call.1} parent=1 // pred_region
      %59 = dma.done [#allocation6], 4096
    $region33: #{tpu_custom_call.1} parent=1 // pred_fallthru
      _
    %v61 = vld [vmem:[#allocation2] sm:$0xff]
    %v62 = vpack.c.bf16 %v61, %v61
    %v63 = vld [vmem:[#allocation5] sm:$0xff]
    %v64 = vld [vmem:[#allocation5 + $0x8] sm:$0xff]
    %v65 = vld [vmem:[#allocation5 + $0x10] sm:$0xff]
    %v66 = vld [vmem:[#allocation5 + $0x18] sm:$0xff]
    %v67 = vld [vmem:[#allocation5 + $0x20] sm:$0xff]
    %v68 = vld [vmem:[#allocation5 + $0x28] sm:$0xff]
    %v69 = vld [vmem:[#allocation5 + $0x30] sm:$0xff]
    %v70 = vld [vmem:[#allocation5 + $0x38] sm:$0xff]
    %v71 = vld [vmem:[%s2] sm:$0xf]
    %v73 = vlaneseq
    %v74 = vshrl.u32 %v73, 7
    %v75 = vsub.s32 0, %v74
    %v76 = vrot.slane %v71, %v75
    %v77 = vlaneseq
    %v78 = vshrl.u32 %v77, 7
    %v79 = vsub.s32 1, %v78
    %v80 = vrot.slane %v71, %v79
    %v81 = vlaneseq
    %v82 = vshrl.u32 %v81, 7
    %v83 = vsub.s32 2, %v82
    %v84 = vrot.slane %v71, %v83
    %v85 = vlaneseq
    %v86 = vshrl.u32 %v85, 7
    %v87 = vsub.s32 3, %v86
    %v88 = vrot.slane %v71, %v87
    %v101 = vunpack.c.l.b16 %v63
    %v102 = vunpack.c.h.b16 %v63
    %v103 = vunpack.c.l.b16 %v64
    %v104 = vunpack.c.h.b16 %v64
    %v105 = vunpack.c.l.b16 %v65
    %v106 = vunpack.c.h.b16 %v65
    %v107 = vunpack.c.l.b16 %v66
    %v108 = vunpack.c.h.b16 %v66
    %v109 = vunpack.c.l.b16 %v67
    %v110 = vunpack.c.h.b16 %v67
    %v111 = vunpack.c.l.b16 %v68
    %v112 = vunpack.c.h.b16 %v68
    %v113 = vunpack.c.l.b16 %v69
    %v114 = vunpack.c.h.b16 %v69
    %v115 = vunpack.c.l.b16 %v70
    %v116 = vunpack.c.h.b16 %v70
    %v117 = vpack.c.b16 %v105, %v101
    %v118 = vpack.c.b16 %v106, %v102
    %v119 = vpack.c.b16 %v107, %v103
    %v120 = vpack.c.b16 %v108, %v104
    %v121 = vpack.c.b16 %v113, %v109
    %v122 = vpack.c.b16 %v114, %v110
    %v123 = vpack.c.b16 %v115, %v111
    %v124 = vpack.c.b16 %v116, %v112
    %vm133 = vcmask 261120
    %v135 = vsel %vm133, %v62, 0
    %137 = vmatprep.subr.bf16.mxu0 %v118
    %138 = vmatpush1.bf16.msra.mxu0 %v117
    %139 = vmatprep.subr.bf16.mxu0 %v122
    %140 = vmatpush1.bf16.msra.mxu0 %v121
    %141 = vmatprep.subr.bf16.mxu0 0
    %142 = vmatpush1.bf16.msra.mxu0 0
    %143 = vmatprep.subr.bf16.mxu0 0
    %144 = vmatpush1.bf16.msra.mxu0 0
    %145 = vmatprep.subr.bf16.mxu0 0
    %146 = vmatpush1.bf16.msra.mxu0 0
    %147 = vmatprep.subr.bf16.mxu0 0
    %148 = vmatpush1.bf16.msra.mxu0 0
    %149 = vmatprep.subr.bf16.mxu0 0
    %150 = vmatpush1.bf16.msra.mxu0 0
    %151 = vmatprep.subr.bf16.mxu0 0
    %152 = vmatpush1.bf16.msra.mxu0 0
    %153 = vmatprep.subr.bf16.mxu0 0
    %154 = vmatpush1.bf16.msra.mxu0 0
    %155 = vmatprep.subr.bf16.mxu0 0
    %156 = vmatpush1.bf16.msra.mxu0 0
    %157 = vmatprep.subr.bf16.mxu0 0
    %158 = vmatpush1.bf16.msra.mxu0 0
    %159 = vmatprep.subr.bf16.mxu0 0
    %160 = vmatpush1.bf16.msra.mxu0 0
    %161 = vmatprep.subr.bf16.mxu0 0
    %162 = vmatpush1.bf16.msra.mxu0 0
    %163 = vmatprep.subr.bf16.mxu0 0
    %164 = vmatpush1.bf16.msra.mxu0 0
    %165 = vmatprep.subr.bf16.mxu0 0
    %166 = vmatpush1.bf16.msra.mxu0 0
    %167 = vmatprep.subr.bf16.mxu0 0
    %168 = vmatpush1.bf16.msra.mxu0 0
    %169 = vmatprep.mubr.bf16.mxu0 0
    %170 = vmatmul.mubr.bf16.gmra.mrb[0].mxu0 %v135
    %v171 = vpop.f32.mrb[0].mxu0
    %v172 = vadd.f32 %v76, %v171
    %v173 = vpop.f32.mrb[0].mxu0
    %v174 = vadd.f32 %v80, %v173
    %v175 = vpop.f32.mrb[0].mxu0
    %v176 = vpop.f32.mrb[0].mxu0
    %177 = vdwg.mxu0
    %178 = vmatprep.subr.bf16.mxu0 %v120
    %179 = vmatpush1.bf16.msra.mxu0 %v119
    %180 = vmatprep.subr.bf16.mxu0 %v124
    %181 = vmatpush1.bf16.msra.mxu0 %v123
    %182 = vmatprep.subr.bf16.mxu0 0
    %183 = vmatpush1.bf16.msra.mxu0 0
    %184 = vmatprep.subr.bf16.mxu0 0
    %185 = vmatpush1.bf16.msra.mxu0 0
    %186 = vmatprep.subr.bf16.mxu0 0
    %187 = vmatpush1.bf16.msra.mxu0 0
    %188 = vmatprep.subr.bf16.mxu0 0
    %189 = vmatpush1.bf16.msra.mxu0 0
    %190 = vmatprep.subr.bf16.mxu0 0
    %191 = vmatpush1.bf16.msra.mxu0 0
    %192 = vmatprep.subr.bf16.mxu0 0
    %193 = vmatpush1.bf16.msra.mxu0 0
    %194 = vmatprep.subr.bf16.mxu0 0
    %195 = vmatpush1.bf16.msra.mxu0 0
    %196 = vmatprep.subr.bf16.mxu0 0
    %197 = vmatpush1.bf16.msra.mxu0 0
    %198 = vmatprep.subr.bf16.mxu0 0
    %199 = vmatpush1.bf16.msra.mxu0 0
    %200 = vmatprep.subr.bf16.mxu0 0
    %201 = vmatpush1.bf16.msra.mxu0 0
    %202 = vmatprep.subr.bf16.mxu0 0
    %203 = vmatpush1.bf16.msra.mxu0 0
    %204 = vmatprep.subr.bf16.mxu0 0
    %205 = vmatpush1.bf16.msra.mxu0 0
    %206 = vmatprep.subr.bf16.mxu0 0
    %207 = vmatpush1.bf16.msra.mxu0 0
    %208 = vmatprep.subr.bf16.mxu0 0
    %209 = vmatpush1.bf16.msra.mxu0 0
    %210 = vmatprep.mubr.bf16.mxu0 0
    %211 = vmatmul.mubr.bf16.gmra.mrb[0].mxu0 %v135
    %v212 = vpop.f32.mrb[0].mxu0
    %v213 = vadd.f32 %v84, %v212
    %v214 = vpop.f32.mrb[0].mxu0
    %v215 = vadd.f32 %v88, %v214
    %v216 = vpop.f32.mrb[0].mxu0
    %v217 = vpop.f32.mrb[0].mxu0
    %218 = vdwg.mxu0
    %v219 = vmax.f32 %v172, 0.0
    %v220 = vmax.f32 %v174, 0.0
    %v221 = vmax.f32 %v213, 0.0
    %v222 = vmax.f32 %v215, 0.0
    %v223 = vpack.c.bf16 %v219, %v219
    %v224 = vpack.c.bf16 %v220, %v220
    %v225 = vpack.c.bf16 %v221, %v221
    %v226 = vpack.c.bf16 %v222, %v222
    %v227 = vld [vmem:[#allocation7] sm:$0xf]
    %v228 = vld [vmem:[#allocation7 + $0x4] sm:$0xf]
    %v229 = vld [vmem:[#allocation7 + $0x8] sm:$0xf]
    %v230 = vld [vmem:[#allocation7 + $0xc] sm:$0xf]
    %v231 = vld [vmem:[#allocation7 + $0x10] sm:$0xf]
    %v232 = vld [vmem:[#allocation7 + $0x14] sm:$0xf]
    %v233 = vld [vmem:[#allocation7 + $0x18] sm:$0xf]
    %v234 = vld [vmem:[#allocation7 + $0x1c] sm:$0xf]
    %v235 = vld [vmem:[#allocation7 + $0x20] sm:$0xf]
    %v236 = vld [vmem:[#allocation7 + $0x24] sm:$0xf]
    %v237 = vld [vmem:[#allocation7 + $0x28] sm:$0xf]
    %v238 = vld [vmem:[#allocation7 + $0x2c] sm:$0xf]
    %v239 = vld [vmem:[#allocation7 + $0x30] sm:$0xf]
    %v240 = vld [vmem:[#allocation7 + $0x34] sm:$0xf]
    %v241 = vld [vmem:[#allocation7 + $0x38] sm:$0xf]
    %v242 = vld [vmem:[#allocation7 + $0x3c] sm:$0xf]
    %v243 = vld [vmem:[#allocation7 + $0x40] sm:$0xf]
    %v244 = vld [vmem:[#allocation7 + $0x44] sm:$0xf]
    %v245 = vld [vmem:[#allocation7 + $0x48] sm:$0xf]
    %v246 = vld [vmem:[#allocation7 + $0x4c] sm:$0xf]
    %v247 = vld [vmem:[#allocation7 + $0x50] sm:$0xf]
    %v248 = vld [vmem:[#allocation7 + $0x54] sm:$0xf]
    %v249 = vld [vmem:[#allocation7 + $0x58] sm:$0xf]
    %v250 = vld [vmem:[#allocation7 + $0x5c] sm:$0xf]
    %v251 = vld [vmem:[#allocation7 + $0x60] sm:$0xf]
    %v252 = vld [vmem:[#allocation7 + $0x64] sm:$0xf]
    %v253 = vld [vmem:[#allocation7 + $0x68] sm:$0xf]
    %v254 = vld [vmem:[#allocation7 + $0x6c] sm:$0xf]
    %v255 = vld [vmem:[#allocation7 + $0x70] sm:$0xf]
    %v256 = vld [vmem:[#allocation7 + $0x74] sm:$0xf]
    %v257 = vld [vmem:[#allocation7 + $0x78] sm:$0xf]
    %v258 = vld [vmem:[#allocation7 + $0x7c] sm:$0xf]
    %v259 = vld [vmem:[#allocation7 + $0x80] sm:$0xf]
    %v260 = vld [vmem:[#allocation7 + $0x84] sm:$0xf]
    %v261 = vld [vmem:[#allocation7 + $0x88] sm:$0xf]
    %v262 = vld [vmem:[#allocation7 + $0x8c] sm:$0xf]
    %v263 = vld [vmem:[#allocation7 + $0x90] sm:$0xf]
    %v264 = vld [vmem:[#allocation7 + $0x94] sm:$0xf]
    %v265 = vld [vmem:[#allocation7 + $0x98] sm:$0xf]
    %v266 = vld [vmem:[#allocation7 + $0x9c] sm:$0xf]
    %v267 = vld [vmem:[#allocation7 + $0xa0] sm:$0xf]
    %v268 = vld [vmem:[#allocation7 + $0xa4] sm:$0xf]
    %v269 = vld [vmem:[#allocation7 + $0xa8] sm:$0xf]
    %v270 = vld [vmem:[#allocation7 + $0xac] sm:$0xf]
    %v271 = vld [vmem:[#allocation7 + $0xb0] sm:$0xf]
    %v272 = vld [vmem:[#allocation7 + $0xb4] sm:$0xf]
    %v273 = vld [vmem:[#allocation7 + $0xb8] sm:$0xf]
    %v274 = vld [vmem:[#allocation7 + $0xbc] sm:$0xf]
    %v275 = vld [vmem:[#allocation7 + $0xc0] sm:$0xf]
    %v276 = vld [vmem:[#allocation7 + $0xc4] sm:$0xf]
    %v277 = vld [vmem:[#allocation7 + $0xc8] sm:$0xf]
    %v278 = vld [vmem:[#allocation7 + $0xcc] sm:$0xf]
    %v279 = vld [vmem:[#allocation7 + $0xd0] sm:$0xf]
    %v280 = vld [vmem:[#allocation7 + $0xd4] sm:$0xf]
    %v281 = vld [vmem:[#allocation7 + $0xd8] sm:$0xf]
    %v282 = vld [vmem:[#allocation7 + $0xdc] sm:$0xf]
    %v283 = vld [vmem:[#allocation7 + $0xe0] sm:$0xf]
    %v284 = vld [vmem:[#allocation7 + $0xe4] sm:$0xf]
    %v285 = vld [vmem:[#allocation7 + $0xe8] sm:$0xf]
    %v286 = vld [vmem:[#allocation7 + $0xec] sm:$0xf]
    %v287 = vld [vmem:[#allocation7 + $0xf0] sm:$0xf]
    %v288 = vld [vmem:[#allocation7 + $0xf4] sm:$0xf]
    %v289 = vld [vmem:[#allocation7 + $0xf8] sm:$0xf]
    %v290 = vld [vmem:[#allocation7 + $0xfc] sm:$0xf]
    %v291 = vld [vmem:[%s4] sm:$0x1]
    %v293 = vlaneseq
    %v294 = vshrl.u32 %v293, 7
    %v295 = vsub.s32 0, %v294
    %v296 = vrot.slane %v291, %v295
    %v362 = vunpack.c.l.b16 %v227
    %v363 = vunpack.c.l.b16 %v228
    %v364 = vunpack.c.l.b16 %v229
    %v365 = vunpack.c.l.b16 %v230
    %v366 = vunpack.c.l.b16 %v231
    %v367 = vunpack.c.l.b16 %v232
    %v368 = vunpack.c.l.b16 %v233
    %v369 = vunpack.c.l.b16 %v234
    %v370 = vunpack.c.l.b16 %v235
    %v371 = vunpack.c.l.b16 %v236
    %v372 = vunpack.c.l.b16 %v237
    %v373 = vunpack.c.l.b16 %v238
    %v374 = vunpack.c.l.b16 %v239
    %v375 = vunpack.c.l.b16 %v240
    %v376 = vunpack.c.l.b16 %v241
    %v377 = vunpack.c.l.b16 %v242
    %v378 = vunpack.c.l.b16 %v243
    %v379 = vunpack.c.l.b16 %v244
    %v380 = vunpack.c.l.b16 %v245
    %v381 = vunpack.c.l.b16 %v246
    %v382 = vunpack.c.l.b16 %v247
    %v383 = vunpack.c.l.b16 %v248
    %v384 = vunpack.c.l.b16 %v249
    %v385 = vunpack.c.l.b16 %v250
    %v386 = vunpack.c.l.b16 %v251
    %v387 = vunpack.c.l.b16 %v252
    %v388 = vunpack.c.l.b16 %v253
    %v389 = vunpack.c.l.b16 %v254
    %v390 = vunpack.c.l.b16 %v255
    %v391 = vunpack.c.l.b16 %v256
    %v392 = vunpack.c.l.b16 %v257
    %v393 = vunpack.c.l.b16 %v258
    %v394 = vunpack.c.l.b16 %v259
    %v395 = vunpack.c.l.b16 %v260
    %v396 = vunpack.c.l.b16 %v261
    %v397 = vunpack.c.l.b16 %v262
    %v398 = vunpack.c.l.b16 %v263
    %v399 = vunpack.c.l.b16 %v264
    %v400 = vunpack.c.l.b16 %v265
    %v401 = vunpack.c.l.b16 %v266
    %v402 = vunpack.c.l.b16 %v267
    %v403 = vunpack.c.l.b16 %v268
    %v404 = vunpack.c.l.b16 %v269
    %v405 = vunpack.c.l.b16 %v270
    %v406 = vunpack.c.l.b16 %v271
    %v407 = vunpack.c.l.b16 %v272
    %v408 = vunpack.c.l.b16 %v273
    %v409 = vunpack.c.l.b16 %v274
    %v410 = vunpack.c.l.b16 %v275
    %v411 = vunpack.c.l.b16 %v276
    %v412 = vunpack.c.l.b16 %v277
    %v413 = vunpack.c.l.b16 %v278
    %v414 = vunpack.c.l.b16 %v279
    %v415 = vunpack.c.l.b16 %v280
    %v416 = vunpack.c.l.b16 %v281
    %v417 = vunpack.c.l.b16 %v282
    %v418 = vunpack.c.l.b16 %v283
    %v419 = vunpack.c.l.b16 %v284
    %v420 = vunpack.c.l.b16 %v285
    %v421 = vunpack.c.l.b16 %v286
    %v422 = vunpack.c.l.b16 %v287
    %v423 = vunpack.c.l.b16 %v288
    %v424 = vunpack.c.l.b16 %v289
    %v425 = vunpack.c.l.b16 %v290
    %v426 = vpack.c.b16 %v363, %v362
    %v427 = vpack.c.b16 %v365, %v364
    %v428 = vpack.c.b16 %v367, %v366
    %v429 = vpack.c.b16 %v369, %v368
    %v430 = vpack.c.b16 %v371, %v370
    %v431 = vpack.c.b16 %v373, %v372
    %v432 = vpack.c.b16 %v375, %v374
    %v433 = vpack.c.b16 %v377, %v376
    %v434 = vpack.c.b16 %v379, %v378
    %v435 = vpack.c.b16 %v381, %v380
    %v436 = vpack.c.b16 %v383, %v382
    %v437 = vpack.c.b16 %v385, %v384
    %v438 = vpack.c.b16 %v387, %v386
    %v439 = vpack.c.b16 %v389, %v388
    %v440 = vpack.c.b16 %v391, %v390
    %v441 = vpack.c.b16 %v393, %v392
    %v442 = vpack.c.b16 %v395, %v394
    %v443 = vpack.c.b16 %v397, %v396
    %v444 = vpack.c.b16 %v399, %v398
    %v445 = vpack.c.b16 %v401, %v400
    %v446 = vpack.c.b16 %v403, %v402
    %v447 = vpack.c.b16 %v405, %v404
    %v448 = vpack.c.b16 %v407, %v406
    %v449 = vpack.c.b16 %v409, %v408
    %v450 = vpack.c.b16 %v411, %v410
    %v451 = vpack.c.b16 %v413, %v412
    %v452 = vpack.c.b16 %v415, %v414
    %v453 = vpack.c.b16 %v417, %v416
    %v454 = vpack.c.b16 %v419, %v418
    %v455 = vpack.c.b16 %v421, %v420
    %v456 = vpack.c.b16 %v423, %v422
    %v457 = vpack.c.b16 %v425, %v424
    %490 = vmatprep.subr.bf16.mxu0 0
    %491 = vmatpush1.bf16.msra.mxu0 %v426
    %492 = vmatprep.subr.bf16.mxu0 0
    %493 = vmatpush1.bf16.msra.mxu0 %v427
    %494 = vmatprep.subr.bf16.mxu0 0
    %495 = vmatpush1.bf16.msra.mxu0 %v428
    %496 = vmatprep.subr.bf16.mxu0 0
    %497 = vmatpush1.bf16.msra.mxu0 %v429
    %498 = vmatprep.subr.bf16.mxu0 0
    %499 = vmatpush1.bf16.msra.mxu0 %v430
    %500 = vmatprep.subr.bf16.mxu0 0
    %501 = vmatpush1.bf16.msra.mxu0 %v431
    %502 = vmatprep.subr.bf16.mxu0 0
    %503 = vmatpush1.bf16.msra.mxu0 %v432
    %504 = vmatprep.subr.bf16.mxu0 0
    %505 = vmatpush1.bf16.msra.mxu0 %v433
    %506 = vmatprep.subr.bf16.mxu0 0
    %507 = vmatpush1.bf16.msra.mxu0 %v434
    %508 = vmatprep.subr.bf16.mxu0 0
    %509 = vmatpush1.bf16.msra.mxu0 %v435
    %510 = vmatprep.subr.bf16.mxu0 0
    %511 = vmatpush1.bf16.msra.mxu0 %v436
    %512 = vmatprep.subr.bf16.mxu0 0
    %513 = vmatpush1.bf16.msra.mxu0 %v437
    %514 = vmatprep.subr.bf16.mxu0 0
    %515 = vmatpush1.bf16.msra.mxu0 %v438
    %516 = vmatprep.subr.bf16.mxu0 0
    %517 = vmatpush1.bf16.msra.mxu0 %v439
    %518 = vmatprep.subr.bf16.mxu0 0
    %519 = vmatpush1.bf16.msra.mxu0 %v440
    %520 = vmatprep.subr.bf16.mxu0 0
    %521 = vmatpush1.bf16.msra.mxu0 %v441
    %522 = vmatprep.mubr.bf16.mxu0 %v224
    %523 = vmatmul.mubr.bf16.gmra.mrb[0].mxu0 %v223
    %v524 = vpop.f32.mrb[0].mxu0
    %v525 = vadd.f32 %v296, %v524
    %v526 = vpop.f32.mrb[0].mxu0
    %v527 = vpop.f32.mrb[0].mxu0
    %v528 = vpop.f32.mrb[0].mxu0
    %529 = vdwg.mxu0
    %530 = vmatprep.subr.bf16.mxu0 0
    %531 = vmatpush1.bf16.msra.mxu0 %v442
    %532 = vmatprep.subr.bf16.mxu0 0
    %533 = vmatpush1.bf16.msra.mxu0 %v443
    %534 = vmatprep.subr.bf16.mxu0 0
    %535 = vmatpush1.bf16.msra.mxu0 %v444
    %536 = vmatprep.subr.bf16.mxu0 0
    %537 = vmatpush1.bf16.msra.mxu0 %v445
    %538 = vmatprep.subr.bf16.mxu0 0
    %539 = vmatpush1.bf16.msra.mxu0 %v446
    %540 = vmatprep.subr.bf16.mxu0 0
    %541 = vmatpush1.bf16.msra.mxu0 %v447
    %542 = vmatprep.subr.bf16.mxu0 0
    %543 = vmatpush1.bf16.msra.mxu0 %v448
    %544 = vmatprep.subr.bf16.mxu0 0
    %545 = vmatpush1.bf16.msra.mxu0 %v449
    %546 = vmatprep.subr.bf16.mxu0 0
    %547 = vmatpush1.bf16.msra.mxu0 %v450
    %548 = vmatprep.subr.bf16.mxu0 0
    %549 = vmatpush1.bf16.msra.mxu0 %v451
    %550 = vmatprep.subr.bf16.mxu0 0
    %551 = vmatpush1.bf16.msra.mxu0 %v452
    %552 = vmatprep.subr.bf16.mxu0 0
    %553 = vmatpush1.bf16.msra.mxu0 %v453
    %554 = vmatprep.subr.bf16.mxu0 0
    %555 = vmatpush1.bf16.msra.mxu0 %v454
    %556 = vmatprep.subr.bf16.mxu0 0
    %557 = vmatpush1.bf16.msra.mxu0 %v455
    %558 = vmatprep.subr.bf16.mxu0 0
    %559 = vmatpush1.bf16.msra.mxu0 %v456
    %560 = vmatprep.subr.bf16.mxu0 0
    %561 = vmatpush1.bf16.msra.mxu0 %v457
    %562 = vmatprep.mubr.bf16.mxu0 %v226
    %563 = vmatmul.mubr.bf16.gmra.mrb[0].mxu0 %v225
    %v564 = vpop.f32.mrb[0].mxu0
    %v565 = vadd.f32 %v525, %v564
    %v566 = vpop.f32.mrb[0].mxu0
    %v567 = vpop.f32.mrb[0].mxu0
    %v568 = vpop.f32.mrb[0].mxu0
    %569 = vdwg.mxu0
    %570 = vst [vmem:[#allocation8] sm:$0xff] %v565
    // Predicated region
    $region34: #{tpu_custom_call.1} parent=1 // pred_check
      _
    $region35: #{tpu_custom_call.1} parent=1 // pred_check_branch
      %572 = sbr.rel (0) target = $region37
    $region36: #{tpu_custom_call.1} parent=1 // pred_region
      %s574 = ssub.s32 128, 128
      %575 = vsyncadd [#allocation4], %s574
      %s577 = sshll.u32 [#allocation8], 4
      %s578 = int_to_ptr.vmem [resolvable:$true] %s577
      %580 = dma.vmem_to_hbm [thread:$0]  %s578, 128, %s5, [#allocation4]
    $region37: #{tpu_custom_call.1} parent=1 // pred_fallthru
      _
    // Predicated region
    $region38: #{tpu_custom_call.1} parent=1 // pred_check
      _
    $region39: #{tpu_custom_call.1} parent=1 // pred_check_branch
      %582 = sbr.rel (0) target = $region41
    $region40: #{tpu_custom_call.1} parent=1 // pred_region
      %583 = dma.done [#allocation4], 128
    $region41: #{tpu_custom_call.1} parent=1 // pred_fallthru
      _
    %584 = vsyncpa [#allocation3], 1
    %585 = vsyncpa [#allocation6], 1
    %586 = vsyncpa [#allocation4], 1

</llo_original>
